<compile_context>
chip_gen: v7x
topology: tpu7x:2x2x1
jax: 0.10.0
libtpu: 0.0.40
codegen_flags: <defaults>
</compile_context>

<pallas_src>
import functools

import jax
import jax.numpy as jnp
from jax import lax
from jax.experimental import pallas as pl
from jax.experimental.pallas import tpu as pltpu


# ---------------------------------------------------------------------------
# Small helpers
# ---------------------------------------------------------------------------
def _round_up(x, m):
    return ((x + m - 1) // m) * m


def _cdiv(a, b):
    return (a + b - 1) // b


def _pick_tile(dim, align, tile_max, min_blocks=1):
    """Pick an `align`-aligned tile <= tile_max that minimizes padding.

    Returns (tile, padded_dim, num_blocks).
    """
    dim_a = _round_up(max(dim, align), align)
    n = max(_cdiv(dim_a, tile_max), min_blocks)
    tile = _round_up(_cdiv(dim_a, n), align)
    return tile, n * tile, n


def _vmem_budget_bytes():
    """Per-generation VMEM cap: ~48 MiB on 64 MiB/TC chips (v7x),
    ~110 MiB on 128 MiB chips (v5e/v6e)."""
    cap = 64 * 1024 * 1024  # conservative fallback (v7x-class)
    try:
        cap = int(pltpu.get_tpu_info().vmem_capacity_bytes)
    except Exception:
        pass
    if cap <= 64 * 1024 * 1024:
        return 48 * 1024 * 1024
    return 110 * 1024 * 1024


# ---------------------------------------------------------------------------
# Kernels
# ---------------------------------------------------------------------------
def _noisy_linear_train_kernel(x_ref, wmu_ref, wsig_ref, eps_in_ref, eps_out_ref,
                               bmu_ref, bsig_ref, o_ref, acc_ref, *, mxu_dtype):
    k = pl.program_id(2)  # reduction (in_features) axis -- last grid dim

    @pl.when(k == 0)
    def _():
        acc_ref[...] = jnp.zeros_like(acc_ref)

    # Algebraic split -- no in-kernel (TN,TK) weight rebuild:
    #   y = x @ w_mu.T + eps_out * ((x * eps_in) @ w_sig.T)
    # All VPU elementwise math stays in f32 (v5e has no bf16 VALU); only the
    # small (TB,TK) operands are cast to the MXU dtype right before the matmul.
    x = x_ref[...]                                   # (TB, TK) f32
    xn = x * eps_in_ref[...]                         # (TB, TK) f32, tiny VPU cost

    # Contraction on the last dims of (TB,TK) and (TN,TK): MXU-native layout,
    # no weight transpose.
    s_mu = lax.dot_general(
        x.astype(mxu_dtype), wmu_ref[...],
        dimension_numbers=(((1,), (1,)), ((), ())),
        preferred_element_type=jnp.float32)          # (TB, TN) f32
    s_sig = lax.dot_general(
        xn.astype(mxu_dtype), wsig_ref[...],
        dimension_numbers=(((1,), (1,)), ((), ())),
        preferred_element_type=jnp.float32)          # (TB, TN) f32

    acc_ref[...] += s_mu + eps_out_ref[...] * s_sig  # eps_out broadcast over rows

    @pl.when(k == pl.num_programs(2) - 1)
    def _():
        bias = bmu_ref[...] + bsig_ref[...] * eps_out_ref[...]   # (1, TN) f32
        o_ref[...] = (acc_ref[...] + bias).astype(o_ref.dtype)


def _noisy_linear_eval_kernel(x_ref, wmu_ref, bmu_ref, o_ref, acc_ref, *, mxu_dtype):
    k = pl.program_id(2)

    @pl.when(k == 0)
    def _():
        acc_ref[...] = jnp.zeros_like(acc_ref)

    acc_ref[...] += lax.dot_general(
        x_ref[...].astype(mxu_dtype), wmu_ref[...],
        dimension_numbers=(((1,), (1,)), ((), ())),
        preferred_element_type=jnp.float32)

    @pl.when(k == pl.num_programs(2) - 1)
    def _():
        o_ref[...] = (acc_ref[...] + bmu_ref[...]).astype(o_ref.dtype)


# ---------------------------------------------------------------------------
# One-time parameter preparation (pad + cast ONCE, not per forward call)
# ---------------------------------------------------------------------------
def prepare_noisy_linear_params(params, *, weight_dtype=jnp.bfloat16,
                                tn_max=512, tk_max=2048):
    """Pad params to tile-aligned shapes and cast the two weight matrices to
    `weight_dtype` once.  The returned dict is what `noisy_linear` consumes."""
    wmu = params["weight_mu"]
    out_f, in_f = wmu.shape

    tk, in_p, _ = _pick_tile(in_f, 128, tk_max)
    # >=2 out-tiles when the padded out dim allows it, so both v7x TensorCores
    # get work along the "parallel" out axis.
    min_j = 2 if _round_up(out_f, 128) >= 256 else 1
    tn, out_p, _ = _pick_tile(out_f, 128, tn_max, min_blocks=min_j)

    def pad2(a, r, c, dt):
        return jnp.pad(a, ((0, r - a.shape[0]), (0, c - a.shape[1]))).astype(dt)

    return dict(
        in_features=in_f, out_features=out_f,
        in_p=in_p, out_p=out_p, tk=tk, tn=tn,
        weight_dtype=jnp.dtype(weight_dtype),
        weight_mu=pad2(wmu, out_p, in_p, weight_dtype),
        weight_sigma=pad2(params["weight_sigma"], out_p, in_p, weight_dtype),
        bias_mu=pad2(params["bias_mu"].reshape(1, out_f), 1, out_p, jnp.float32),
        bias_sigma=pad2(params["bias_sigma"].reshape(1, out_f), 1, out_p, jnp.float32),
        epsilon_in=pad2(params["epsilon_in"].reshape(1, in_f), 1, in_p, jnp.float32),
        epsilon_out=pad2(params["epsilon_out"].reshape(1, out_f), 1, out_p, jnp.float32),
    )


# ---------------------------------------------------------------------------
# Forward wrapper
# ---------------------------------------------------------------------------
def noisy_linear(x, prepared, *, training=True, tb_max=256):
    """Pallas-backed NoisyLinear forward.  `prepared` comes from
    prepare_noisy_linear_params (pre-padded, pre-cast weights)."""
    B, in_f = x.shape
    assert in_f == prepared["in_features"]
    in_p, out_p = prepared["in_p"], prepared["out_p"]
    tk, tn = prepared["tk"], prepared["tn"]
    out_f = prepared["out_features"]
    mxu_dtype = prepared["weight_dtype"]

    tb, b_p, nb = _pick_tile(B, 8, tb_max)
    x_p = jnp.pad(x, ((0, b_p - B), (0, in_p - in_f)))

    nj, nk = out_p // tn, in_p // tk
    grid = (nb, nj, nk)   # (batch: parallel, out: parallel, in: reduction/arbitrary)

    x_spec = pl.BlockSpec((tb, tk), lambda b, j, k: (b, k))
    w_spec = pl.BlockSpec((tn, tk), lambda b, j, k: (j, k))
    vec_in_spec = pl.BlockSpec((1, tk), lambda b, j, k: (0, k))
    vec_out_spec = pl.BlockSpec((1, tn), lambda b, j, k: (0, j))
    out_spec = pl.BlockSpec((tb, tn), lambda b, j, k: (b, j))

    if training:
        kernel = functools.partial(_noisy_linear_train_kernel, mxu_dtype=mxu_dtype)
        in_specs = [x_spec, w_spec, w_spec, vec_in_spec, vec_out_spec,
                    vec_out_spec, vec_out_spec]
        args = (x_p, prepared["weight_mu"], prepared["weight_sigma"],
                prepared["epsilon_in"], prepared["epsilon_out"],
                prepared["bias_mu"], prepared["bias_sigma"])
        n_w = 2          # weight streams (mu + sigma)
        mm_factor = 2    # two MXU passes per tile
    else:
        kernel = functools.partial(_noisy_linear_eval_kernel, mxu_dtype=mxu_dtype)
        in_specs = [x_spec, w_spec, vec_out_spec]
        args = (x_p, prepared["weight_mu"], prepared["bias_mu"])
        n_w = 1
        mm_factor = 1

    w_item = jnp.dtype(mxu_dtype).itemsize
    x_item = jnp.dtype(x.dtype).itemsize
    o_item = jnp.dtype(x.dtype).itemsize

    # Advisory cost estimate for the XLA scheduler.
    bytes_accessed = int(n_w * out_p * in_p * w_item * nb      # weights (per batch tile)
                         + b_p * in_p * x_item * nj            # x (per out tile)
                         + b_p * out_p * o_item)               # output
    cost = pl.CostEstimate(flops=int(2 * b_p * in_p * out_p * mm_factor),
                           transcendentals=0,
                           bytes_accessed=bytes_accessed)

    # VMEM: double-buffered weight streams dominate.  At the bf16 defaults
    # (tn=512, tk=2048) that is 2*2*512*2048*2B = 8 MiB -- well under the v7x
    # 48 MiB budget; on v5e/v6e the budget relaxes to ~110 MiB.
    tile_bytes = (2 * n_w * tn * tk * w_item          # weight double buffers
                  + 2 * tb * tk * x_item              # x tiles
                  + 2 * tb * tn * o_item              # out tiles
                  + tb * tn * 4                       # f32 accumulator
                  + 4 * (2 * tk + 6 * tn))            # eps / bias vectors
    vmem_limit = int(min(max(2 * tile_bytes, 16 * 1024 * 1024), _vmem_budget_bytes()))

    out_padded = pl.pallas_call(
        kernel,
        out_shape=jax.ShapeDtypeStruct((b_p, out_p), x.dtype),
        grid_spec=pltpu.PrefetchScalarGridSpec(
            num_scalar_prefetch=0,
            grid=grid,
            in_specs=in_specs,
            out_specs=out_spec,
            scratch_shapes=[pltpu.VMEM((tb, tn), jnp.float32)]),
        compiler_params=pltpu.CompilerParams(
            dimension_semantics=("parallel", "parallel", "arbitrary"),
            vmem_limit_bytes=vmem_limit),
        cost_estimate=cost,
    )(*args)

    return out_padded[:B, :out_f]


# ---------------------------------------------------------------------------
# Deterministic parameter construction mirroring NoisyLinear.__init__ /
# reset_parameters / reset_noise (synthetic init, plain-JAX glue).
# weight_epsilon is never materialized; the factor vectors are kept instead.
# ---------------------------------------------------------------------------
def _scale_noise(key, size):
    v = jax.random.normal(key, (size,), dtype=jnp.float32)
    return jnp.sign(v) * jnp.sqrt(jnp.abs(v))


def make_noisy_linear_params(key, in_features, out_features, sigma_init=0.5):
    k_wmu, k_bmu, k_ein, k_eout = jax.random.split(key, 4)
    mu_range = 1.0 / (in_features ** 0.5)

    weight_mu = jax.random.uniform(
        k_wmu, (out_features, in_features), jnp.float32, -mu_range, mu_range)
    bias_mu = jax.random.uniform(
        k_bmu, (out_features,), jnp.float32, -mu_range, mu_range)
    weight_sigma = jnp.full((out_features, in_features),
                            sigma_init / (in_features ** 0.5), jnp.float32)
    bias_sigma = jnp.full((out_features,),
                          sigma_init / (out_features ** 0.5), jnp.float32)

    epsilon_in = _scale_noise(k_ein, in_features)      # (in,)
    epsilon_out = _scale_noise(k_eout, out_features)   # (out,)  (== bias_epsilon)

    return dict(weight_mu=weight_mu, weight_sigma=weight_sigma,
                bias_mu=bias_mu, bias_sigma=bias_sigma,
                epsilon_in=epsilon_in, epsilon_out=epsilon_out)


if __name__ == "__main__":
    key = jax.random.PRNGKey(0)
    k_params, k_x = jax.random.split(key)

    B, in_features, out_features = 2, 32, 64
    raw = make_noisy_linear_params(k_params, in_features, out_features)
    x = jax.random.normal(k_x, (B, in_features), dtype=jnp.float32)

    # Pure-JAX reference, identical math to the PyTorch forward.
    w_eps_ref = jnp.outer(raw["epsilon_out"], raw["epsilon_in"])
    w_ref = raw["weight_mu"] + raw["weight_sigma"] * w_eps_ref
    b_ref = raw["bias_mu"] + raw["bias_sigma"] * raw["epsilon_out"]
    ref_train = x @ w_ref.T + b_ref
    ref_eval = x @ raw["weight_mu"].T + raw["bias_mu"]

    # f32 weight storage: strict checks (training + eval).
    p32 = prepare_noisy_linear_params(raw, weight_dtype=jnp.float32)
    out_train32 = jax.block_until_ready(noisy_linear(x, p32, training=True))
    out_eval32 = jax.block_until_ready(noisy_linear(x, p32, training=False))
    assert out_train32.shape == (B, out_features)
    assert jnp.allclose(out_train32, ref_train, atol=1e-4, rtol=1e-4)
    assert jnp.allclose(out_eval32, ref_eval, atol=1e-4, rtol=1e-4)

    # bf16 weight storage (default fast path, halves weight HBM bytes):
    # loose check -- mu/sigma are quantized to bf16 in HBM by design.
    pbf = prepare_noisy_linear_params(raw, weight_dtype=jnp.bfloat16)
    out_trainbf = jax.block_until_ready(noisy_linear(x, pbf, training=True))
    out_evalbf = jax.block_until_ready(noisy_linear(x, pbf, training=False))
    assert jnp.allclose(out_trainbf, ref_train, atol=5e-2, rtol=5e-2)
    assert jnp.allclose(out_evalbf, ref_eval, atol=5e-2, rtol=5e-2)

    print("KERNEL_OK")
</pallas_src>

<mosaic_0001>
module attributes {stable_mosaic.version = 11 : i64} {
  func.func @_noisy_linear_train_kernel(%arg0: i32, %arg1: i32, %arg2: i32, %arg3: memref<8x128xf32, #tpu.memory_space<vmem>>, %arg4: memref<128x128xf32, #tpu.memory_space<vmem>>, %arg5: memref<128x128xf32, #tpu.memory_space<vmem>>, %arg6: memref<1x128xf32, #tpu.memory_space<vmem>>, %arg7: memref<1x128xf32, #tpu.memory_space<vmem>>, %arg8: memref<1x128xf32, #tpu.memory_space<vmem>>, %arg9: memref<1x128xf32, #tpu.memory_space<vmem>>, %arg10: memref<8x128xf32, #tpu.memory_space<vmem>>, %arg11: memref<8x128xf32, #tpu.memory_space<vmem>>) attributes {dimension_semantics = [#tpu.dimension_semantics<parallel>, #tpu.dimension_semantics<parallel>, #tpu.dimension_semantics<arbitrary>], iteration_bounds = array<i64: 1, 1, 1>, scalar_prefetch = 0 : i64, scratch_operands = 1 : i64, tpu.core_type = #tpu.core_type<tc>, window_params = [{transform_indices = @transform_0, window_bounds = array<i64: 8, 128>}, {transform_indices = @transform_1, window_bounds = array<i64: 128, 128>}, {transform_indices = @transform_2, window_bounds = array<i64: 128, 128>}, {transform_indices = @transform_3, window_bounds = array<i64: 1, 128>}, {transform_indices = @transform_4, window_bounds = array<i64: 1, 128>}, {transform_indices = @transform_5, window_bounds = array<i64: 1, 128>}, {transform_indices = @transform_6, window_bounds = array<i64: 1, 128>}, {transform_indices = @transform_7, window_bounds = array<i64: 8, 128>}]} {
    %c0_i32 = arith.constant 0 : i32
    %0 = arith.cmpi eq, %arg2, %c0_i32 : i32
    %1 = arith.extui %0 : i1 to i32
    %c0_i32_0 = arith.constant 0 : i32
    %2 = arith.cmpi ne, %1, %c0_i32_0 : i32
    scf.if %2 {
      %cst_17 = arith.constant 0.000000e+00 : f32
      %21 = vector.broadcast %cst_17 : f32 to vector<8x128xf32>
      %c0_18 = arith.constant 0 : index
      %c0_19 = arith.constant 0 : index
      %22 = vector.load %arg11[%c0_18, %c0_19] : memref<8x128xf32, #tpu.memory_space<vmem>>, vector<8x128xf32>
      tpu.vector_store %arg11[%c0_18, %c0_19], %21 {strides = array<i32>} : memref<8x128xf32, #tpu.memory_space<vmem>>, vector<8x128xf32>,
    } else {
    }
    %c0 = arith.constant 0 : index
    %c0_1 = arith.constant 0 : index
    %3 = vector.load %arg3[%c0, %c0_1] : memref<8x128xf32, #tpu.memory_space<vmem>>, vector<8x128xf32>
    %c0_2 = arith.constant 0 : index
    %c0_3 = arith.constant 0 : index
    %4 = vector.load %arg6[%c0_2, %c0_3] : memref<1x128xf32, #tpu.memory_space<vmem>>, vector<1x128xf32>
    %5 = vector.broadcast %4 : vector<1x128xf32> to vector<8x128xf32>
    %6 = arith.mulf %3, %5 : vector<8x128xf32>
    %c0_4 = arith.constant 0 : index
    %c0_5 = arith.constant 0 : index
    %7 = vector.load %arg4[%c0_4, %c0_5] : memref<128x128xf32, #tpu.memory_space<vmem>>, vector<128x128xf32>
    %cst = arith.constant dense<0.000000e+00> : vector<8x128xf32>
    %8 = tpu.matmul %3, %7, %cst {dimension_numbers = #tpu.dot_dimension_numbers<[1], [1], [0], [0], [0, 0, 1, 0], [], []>} : vector<8x128xf32>, vector<128x128xf32>, vector<8x128xf32> -> vector<8x128xf32>
    %c0_6 = arith.constant 0 : index
    %c0_7 = arith.constant 0 : index
    %9 = vector.load %arg5[%c0_6, %c0_7] : memref<128x128xf32, #tpu.memory_space<vmem>>, vector<128x128xf32>
    %cst_8 = arith.constant dense<0.000000e+00> : vector<8x128xf32>
    %10 = tpu.matmul %6, %9, %cst_8 {dimension_numbers = #tpu.dot_dimension_numbers<[1], [1], [0], [0], [0, 0, 1, 0], [], []>} : vector<8x128xf32>, vector<128x128xf32>, vector<8x128xf32> -> vector<8x128xf32>
    %c0_9 = arith.constant 0 : index
    %c0_10 = arith.constant 0 : index
    %11 = vector.load %arg11[%c0_9, %c0_10] : memref<8x128xf32, #tpu.memory_space<vmem>>, vector<8x128xf32>
    %c0_11 = arith.constant 0 : index
    %c0_12 = arith.constant 0 : index
    %12 = vector.load %arg7[%c0_11, %c0_12] : memref<1x128xf32, #tpu.memory_space<vmem>>, vector<1x128xf32>
    %13 = vector.broadcast %12 : vector<1x128xf32> to vector<8x128xf32>
    %14 = arith.mulf %13, %10 : vector<8x128xf32>
    %15 = arith.addf %8, %14 : vector<8x128xf32>
    %16 = arith.addf %11, %15 : vector<8x128xf32>
    %c0_13 = arith.constant 0 : index
    %c0_14 = arith.constant 0 : index
    %17 = vector.load %arg11[%c0_13, %c0_14] : memref<8x128xf32, #tpu.memory_space<vmem>>, vector<8x128xf32>
    tpu.vector_store %arg11[%c0_13, %c0_14], %16 {strides = array<i32>} : memref<8x128xf32, #tpu.memory_space<vmem>>, vector<8x128xf32>,
    %c0_i32_15 = arith.constant 0 : i32
    %18 = arith.cmpi eq, %arg2, %c0_i32_15 : i32
    %19 = arith.extui %18 : i1 to i32
    %c0_i32_16 = arith.constant 0 : i32
    %20 = arith.cmpi ne, %19, %c0_i32_16 : i32
    scf.if %20 {
      %c0_17 = arith.constant 0 : index
      %c0_18 = arith.constant 0 : index
      %21 = vector.load %arg8[%c0_17, %c0_18] : memref<1x128xf32, #tpu.memory_space<vmem>>, vector<1x128xf32>
      %c0_19 = arith.constant 0 : index
      %c0_20 = arith.constant 0 : index
      %22 = vector.load %arg9[%c0_19, %c0_20] : memref<1x128xf32, #tpu.memory_space<vmem>>, vector<1x128xf32>
      %c0_21 = arith.constant 0 : index
      %c0_22 = arith.constant 0 : index
      %23 = vector.load %arg7[%c0_21, %c0_22] : memref<1x128xf32, #tpu.memory_space<vmem>>, vector<1x128xf32>
      %24 = arith.mulf %22, %23 : vector<1x128xf32>
      %25 = arith.addf %21, %24 : vector<1x128xf32>
      %c0_23 = arith.constant 0 : index
      %c0_24 = arith.constant 0 : index
      %26 = vector.load %arg11[%c0_23, %c0_24] : memref<8x128xf32, #tpu.memory_space<vmem>>, vector<8x128xf32>
      %27 = vector.broadcast %25 : vector<1x128xf32> to vector<8x128xf32>
      %28 = arith.addf %26, %27 : vector<8x128xf32>
      %c0_25 = arith.constant 0 : index
      %c0_26 = arith.constant 0 : index
      %29 = vector.load %arg10[%c0_25, %c0_26] : memref<8x128xf32, #tpu.memory_space<vmem>>, vector<8x128xf32>
      tpu.vector_store %arg10[%c0_25, %c0_26], %28 {strides = array<i32>} : memref<8x128xf32, #tpu.memory_space<vmem>>, vector<8x128xf32>,
    } else {
    }
    return
  }
  func.func @transform_0(%arg0: i32, %arg1: i32, %arg2: i32) -> (i32, i32) {
    %c0_i32 = arith.constant 0 : i32
    return %arg0, %arg2 : i32, i32
  }
  func.func @transform_1(%arg0: i32, %arg1: i32, %arg2: i32) -> (i32, i32) {
    %c0_i32 = arith.constant 0 : i32
    return %arg1, %arg2 : i32, i32
  }
  func.func @transform_2(%arg0: i32, %arg1: i32, %arg2: i32) -> (i32, i32) {
    %c0_i32 = arith.constant 0 : i32
    return %arg1, %arg2 : i32, i32
  }
  func.func @transform_3(%arg0: i32, %arg1: i32, %arg2: i32) -> (i32, i32) {
    %c0_i32 = arith.constant 0 : i32
    %c0_i32_0 = arith.constant 0 : i32
    return %c0_i32, %arg2 : i32, i32
  }
  func.func @transform_4(%arg0: i32, %arg1: i32, %arg2: i32) -> (i32, i32) {
    %c0_i32 = arith.constant 0 : i32
    %c0_i32_0 = arith.constant 0 : i32
    return %c0_i32, %arg1 : i32, i32
  }
  func.func @transform_5(%arg0: i32, %arg1: i32, %arg2: i32) -> (i32, i32) {
    %c0_i32 = arith.constant 0 : i32
    %c0_i32_0 = arith.constant 0 : i32
    return %c0_i32, %arg1 : i32, i32
  }
  func.func @transform_6(%arg0: i32, %arg1: i32, %arg2: i32) -> (i32, i32) {
    %c0_i32 = arith.constant 0 : i32
    %c0_i32_0 = arith.constant 0 : i32
    return %c0_i32, %arg1 : i32, i32
  }
  func.func @transform_7(%arg0: i32, %arg1: i32, %arg2: i32) -> (i32, i32) {
    %c0_i32 = arith.constant 0 : i32
    return %arg0, %arg1 : i32, i32
  }
}

</mosaic_0001>

<llo_original>
// kernel: tpu_custom_call.1
$region0: #{tpu_custom_call.1}
  #allocation0 [shape = 'u32[]', space=smem, size = 0x4, offset = 0x4, fixed_abs, tag = 'smem constant byte address 0x4 - core index']
  #allocation1 [shape = 'u32[144,128]{1,0:T(1,128)}', space=vmem, size = 0x12000, scoped, tag = 'internal scratch']
  #allocation2 [shape = 'f32[8,128]{1,0:T(8,128)}', space=vmem, size = 0x1000, scoped, tag = 'scratch operand']
  %s0 = inlined_call_operand.hbm [shape: f32[8,128], index: 0, kind: input, shape index: {}]
  %s1 = inlined_call_operand.hbm [shape: f32[128,128], index: 1, kind: input, shape index: {}]
  %s2 = inlined_call_operand.hbm [shape: f32[128,128], index: 2, kind: input, shape index: {}]
  %s3 = inlined_call_operand.vmem [shape: f32[1,128], index: 3, kind: input, shape index: {}]
  %s4 = inlined_call_operand.vmem [shape: f32[1,128], index: 4, kind: input, shape index: {}]
  %s5 = inlined_call_operand.vmem [shape: f32[1,128], index: 5, kind: input, shape index: {}]
  %s6 = inlined_call_operand.vmem [shape: f32[1,128], index: 6, kind: input, shape index: {}]
  %s7 = inlined_call_operand.hbm [shape: f32[8,128], index: 7, kind: output, shape index: {}]
  %s8 = sld [smem:[#allocation0]]
  $region58: #{tpu_custom_call.1} parent=0
    _
  %s10 = ssub.s32 1, %s8
  %s11 = scalar_select 0, %s10, %s8
  $region1: #{tpu_custom_call.1} parent=0
    #allocation3 [shape = 'u8[4096]{0}', space=vmem, size = 0x1000, scoped, tag = 'input window, operand 0, single buffered']
    #allocation4 [shape = 's32[1]{0}', space=sflag, size = 0x4, scoped, tag = 'scoped memory for tpu_custom_call.1']
    #allocation5 [shape = 's32[1]{0}', space=sflag, size = 0x4, scoped, tag = 'scoped memory for tpu_custom_call.1']
    #allocation6 [shape = 'u8[65536]{0}', space=vmem, size = 0x10000, scoped, tag = 'input window, operand 1, single buffered']
    #allocation7 [shape = 's32[1]{0}', space=sflag, size = 0x4, scoped, tag = 'scoped memory for tpu_custom_call.1']
    #allocation8 [shape = 'u8[65536]{0}', space=vmem, size = 0x10000, scoped, tag = 'input window, operand 2, single buffered']
    #allocation9 [shape = 'u8[4096]{0}', space=vmem, size = 0x1000, scoped, tag = 'output window, operand 0, single buffered']
    %12 = vsyncpa [#allocation4], 0
    %13 = vsyncpa [#allocation7], 0
    %14 = vsyncpa [#allocation5], 0
    // Predicated region
    $region2: #{tpu_custom_call.1} parent=1 // pred_check
      _
    $region3: #{tpu_custom_call.1} parent=1 // pred_check_branch
      %16 = sbr.rel (0) target = $region5
    $region4: #{tpu_custom_call.1} parent=1 // pred_region
      %s18 = ssub.s32 128, 128
      %19 = vsyncadd [#allocation4], %s18
      %s21 = sshll.u32 [#allocation3], 4
      %s22 = int_to_ptr.vmem [resolvable:$true] %s21
      %24 = dma.hbm_to_vmem [thread:$0]  %s0, 128, %s22, [#allocation4]
    $region5: #{tpu_custom_call.1} parent=1 // pred_fallthru
      _
    // Predicated region
    $region6: #{tpu_custom_call.1} parent=1 // pred_check
      _
    $region7: #{tpu_custom_call.1} parent=1 // pred_check_branch
      %26 = sbr.rel (0) target = $region9
    $region8: #{tpu_custom_call.1} parent=1 // pred_region
      %s28 = ssub.s32 2048, 2048
      %29 = vsyncadd [#allocation7], %s28
      %s30 = sshll.u32 [#allocation6], 4
      %s31 = int_to_ptr.vmem [resolvable:$true] %s30
      %36 = dma.hbm_to_vmem [thread:$0]  %s1, 2048, %s31, [#allocation7], 128, 128, 8
    $region9: #{tpu_custom_call.1} parent=1 // pred_fallthru
      _
    // Predicated region
    $region10: #{tpu_custom_call.1} parent=1 // pred_check
      _
    $region11: #{tpu_custom_call.1} parent=1 // pred_check_branch
      %38 = sbr.rel (0) target = $region13
    $region12: #{tpu_custom_call.1} parent=1 // pred_region
      %s40 = ssub.s32 2048, 2048
      %41 = vsyncadd [#allocation7], %s40
      %s42 = sshll.u32 [#allocation8], 4
      %s43 = int_to_ptr.vmem [resolvable:$true] %s42
      %48 = dma.hbm_to_vmem [thread:$0]  %s2, 2048, %s43, [#allocation7], 128, 128, 8
    $region13: #{tpu_custom_call.1} parent=1 // pred_fallthru
      _
    // Predicated region
    $region14: #{tpu_custom_call.1} parent=1 // pred_check
      _
    $region15: #{tpu_custom_call.1} parent=1 // pred_check_branch
      %50 = sbr.rel (0) target = $region17
    $region16: #{tpu_custom_call.1} parent=1 // pred_region
      _
    $region17: #{tpu_custom_call.1} parent=1 // pred_fallthru
      _
    // Predicated region
    $region18: #{tpu_custom_call.1} parent=1 // pred_check
      _
    $region19: #{tpu_custom_call.1} parent=1 // pred_check_branch
      %52 = sbr.rel (0) target = $region21
    $region20: #{tpu_custom_call.1} parent=1 // pred_region
      _
    $region21: #{tpu_custom_call.1} parent=1 // pred_fallthru
      _
    // Predicated region
    $region22: #{tpu_custom_call.1} parent=1 // pred_check
      _
    $region23: #{tpu_custom_call.1} parent=1 // pred_check_branch
      %54 = sbr.rel (0) target = $region25
    $region24: #{tpu_custom_call.1} parent=1 // pred_region
      _
    $region25: #{tpu_custom_call.1} parent=1 // pred_fallthru
      _
    // Predicated region
    $region26: #{tpu_custom_call.1} parent=1 // pred_check
      _
    $region27: #{tpu_custom_call.1} parent=1 // pred_check_branch
      %56 = sbr.rel (0) target = $region29
    $region28: #{tpu_custom_call.1} parent=1 // pred_region
      _
    $region29: #{tpu_custom_call.1} parent=1 // pred_fallthru
      _
    // Predicated region
    $region30: #{tpu_custom_call.1} parent=1 // pred_check
      _
    $region31: #{tpu_custom_call.1} parent=1 // pred_check_branch
      %58 = sbr.rel (0) target = $region33
    $region32: #{tpu_custom_call.1} parent=1 // pred_region
      %59 = dma.done [#allocation4], 128
    $region33: #{tpu_custom_call.1} parent=1 // pred_fallthru
      _
    // Predicated region
    $region34: #{tpu_custom_call.1} parent=1 // pred_check
      _
    $region35: #{tpu_custom_call.1} parent=1 // pred_check_branch
      %61 = sbr.rel (0) target = $region37
    $region36: #{tpu_custom_call.1} parent=1 // pred_region
      %62 = dma.done [#allocation7], 2048
    $region37: #{tpu_custom_call.1} parent=1 // pred_fallthru
      _
    // Predicated region
    $region38: #{tpu_custom_call.1} parent=1 // pred_check
      _
    $region39: #{tpu_custom_call.1} parent=1 // pred_check_branch
      %64 = sbr.rel (0) target = $region41
    $region40: #{tpu_custom_call.1} parent=1 // pred_region
      %65 = dma.done [#allocation7], 2048
    $region41: #{tpu_custom_call.1} parent=1 // pred_fallthru
      _
    %p66 = scmp.eq.s32.totalorder 0, 0
    // Predicated region
    $region42: #{tpu_custom_call.1} parent=1 // pred_check
      %p67 = pneg %p66
    $region43: #{tpu_custom_call.1} parent=1 // pred_check_branch
      %69 = sbr.rel (%p67) target = $region45
    $region44: #{tpu_custom_call.1} parent=1 // pred_region
      %70 = vst [vmem:[#allocation2] sm:$0xff] 0.0
    $region45: #{tpu_custom_call.1} parent=1 // pred_fallthru
      _
    %v71 = vld [vmem:[#allocation3] sm:$0xff]
    %v72 = vld [vmem:[%s3] sm:$0x1]
    %v74 = vlaneseq
    %v75 = vshrl.u32 %v74, 7
    %v76 = vsub.s32 0, %v75
    %v77 = vrot.slane %v72, %v76
    %v79 = vmul.f32 %v71, %v77
    %v80 = vld [vmem:[#allocation6] sm:$0xff]
    %v81 = vld [vmem:[#allocation6 + $0x8] sm:$0xff]
    %v82 = vld [vmem:[#allocation6 + $0x10] sm:$0xff]
    %v83 = vld [vmem:[#allocation6 + $0x18] sm:$0xff]
    %v84 = vld [vmem:[#allocation6 + $0x20] sm:$0xff]
    %v85 = vld [vmem:[#allocation6 + $0x28] sm:$0xff]
    %v86 = vld [vmem:[#allocation6 + $0x30] sm:$0xff]
    %v87 = vld [vmem:[#allocation6 + $0x38] sm:$0xff]
    %v88 = vld [vmem:[#allocation6 + $0x40] sm:$0xff]
    %v89 = vld [vmem:[#allocation6 + $0x48] sm:$0xff]
    %v90 = vld [vmem:[#allocation6 + $0x50] sm:$0xff]
    %v91 = vld [vmem:[#allocation6 + $0x58] sm:$0xff]
    %v92 = vld [vmem:[#allocation6 + $0x60] sm:$0xff]
    %v93 = vld [vmem:[#allocation6 + $0x68] sm:$0xff]
    %v94 = vld [vmem:[#allocation6 + $0x70] sm:$0xff]
    %v95 = vld [vmem:[#allocation6 + $0x78] sm:$0xff]
    %v96 = vld [vmem:[#allocation8] sm:$0xff]
    %v97 = vld [vmem:[#allocation8 + $0x8] sm:$0xff]
    %v98 = vld [vmem:[#allocation8 + $0x10] sm:$0xff]
    %v99 = vld [vmem:[#allocation8 + $0x18] sm:$0xff]
    %v100 = vld [vmem:[#allocation8 + $0x20] sm:$0xff]
    %v101 = vld [vmem:[#allocation8 + $0x28] sm:$0xff]
    %v102 = vld [vmem:[#allocation8 + $0x30] sm:$0xff]
    %v103 = vld [vmem:[#allocation8 + $0x38] sm:$0xff]
    %v104 = vld [vmem:[#allocation8 + $0x40] sm:$0xff]
    %v105 = vld [vmem:[#allocation8 + $0x48] sm:$0xff]
    %v106 = vld [vmem:[#allocation8 + $0x50] sm:$0xff]
    %v107 = vld [vmem:[#allocation8 + $0x58] sm:$0xff]
    %v108 = vld [vmem:[#allocation8 + $0x60] sm:$0xff]
    %v109 = vld [vmem:[#allocation8 + $0x68] sm:$0xff]
    %v110 = vld [vmem:[#allocation8 + $0x70] sm:$0xff]
    %v111 = vld [vmem:[#allocation8 + $0x78] sm:$0xff]
    %112 = vmatprep.subr.mxu0 0.0
    %113 = vmatpush1.xpose.msra.mxu0 %v96
    %114 = vmatprep.subr.mxu0 0.0
    %115 = vmatpush1.xpose.msra.mxu0 %v97
    %116 = vmatprep.subr.mxu0 0.0
    %117 = vmatpush1.xpose.msra.mxu0 %v98
    %118 = vmatprep.subr.mxu0 0.0
    %119 = vmatpush1.xpose.msra.mxu0 %v99
    %120 = vmatprep.subr.mxu0 0.0
    %121 = vmatpush1.xpose.msra.mxu0 %v100
    %122 = vmatprep.subr.mxu0 0.0
    %123 = vmatpush1.xpose.msra.mxu0 %v101
    %124 = vmatprep.subr.mxu0 0.0
    %125 = vmatpush1.xpose.msra.mxu0 %v102
    %126 = vmatprep.subr.mxu0 0.0
    %127 = vmatpush1.xpose.msra.mxu0 %v103
    %128 = vmatprep.subr.mxu0 0.0
    %129 = vmatpush1.xpose.msra.mxu0 %v104
    %130 = vmatprep.subr.mxu0 0.0
    %131 = vmatpush1.xpose.msra.mxu0 %v105
    %132 = vmatprep.subr.mxu0 0.0
    %133 = vmatpush1.xpose.msra.mxu0 %v106
    %134 = vmatprep.subr.mxu0 0.0
    %135 = vmatpush1.xpose.msra.mxu0 %v107
    %136 = vmatprep.subr.mxu0 0.0
    %137 = vmatpush1.xpose.msra.mxu0 %v108
    %138 = vmatprep.subr.mxu0 0.0
    %139 = vmatpush1.xpose.msra.mxu0 %v109
    %140 = vmatprep.subr.mxu0 0.0
    %141 = vmatpush1.xpose.msra.mxu0 %v110
    %142 = vmatprep.subr.mxu0 0.0
    %143 = vmatpush1.xpose.msra.mxu0 %v111
    %144 = vmatprep.subr.mxu0 0.0
    %145 = vmatpush1.xpose.msra.mxu0 0.0
    %146 = vmatprep.subr.mxu0 0.0
    %147 = vmatpush1.xpose.msra.mxu0 0.0
    %148 = vmatprep.subr.mxu0 0.0
    %149 = vmatpush1.xpose.msra.mxu0 0.0
    %150 = vmatprep.subr.mxu0 0.0
    %151 = vmatpush1.xpose.msra.mxu0 0.0
    %152 = vmatprep.subr.mxu0 0.0
    %153 = vmatpush1.xpose.msra.mxu0 0.0
    %154 = vmatprep.subr.mxu0 0.0
    %155 = vmatpush1.xpose.msra.mxu0 0.0
    %156 = vmatprep.subr.mxu0 0.0
    %157 = vmatpush1.xpose.msra.mxu0 0.0
    %158 = vmatprep.subr.mxu0 0.0
    %159 = vmatpush1.xpose.msra.mxu0 0.0
    %160 = vmatprep.subr.mxu0 0.0
    %161 = vmatpush1.xpose.msra.mxu0 0.0
    %162 = vmatprep.subr.mxu0 0.0
    %163 = vmatpush1.xpose.msra.mxu0 0.0
    %164 = vmatprep.subr.mxu0 0.0
    %165 = vmatpush1.xpose.msra.mxu0 0.0
    %166 = vmatprep.subr.mxu0 0.0
    %167 = vmatpush1.xpose.msra.mxu0 0.0
    %168 = vmatprep.subr.mxu0 0.0
    %169 = vmatpush1.xpose.msra.mxu0 0.0
    %170 = vmatprep.subr.mxu0 0.0
    %171 = vmatpush1.xpose.msra.mxu0 0.0
    %172 = vmatprep.subr.mxu0 0.0
    %173 = vmatpush1.xpose.msra.mxu0 0.0
    %174 = vmatprep.subr.mxu0 0.0
    %175 = vmatpush1.xpose.msra.mxu0 0.0
    %176 = vmatprep.mubr.f32.mxu0 0.0
    %177 = vmatmul.mubr.f32.gmra.mrb[0].mxu0 %v79
    %v178 = vpop.f32.mrb[0].mxu0
    %v179 = vadd.f32 0.0, %v178
    %v180 = vpop.f32.mrb[0].mxu0
    %181 = vdwg.mxu0
    %v182 = vld [vmem:[#allocation2] sm:$0xff]
    %v183 = vld [vmem:[%s4] sm:$0x1]
    %v185 = vlaneseq
    %v186 = vshrl.u32 %v185, 7
    %v187 = vsub.s32 0, %v186
    %v188 = vrot.slane %v183, %v187
    %v190 = vmul.f32 %v188, %v179
    %191 = vmatprep.subr.mxu0 0.0
    %192 = vmatpush1.xpose.msra.mxu0 %v80
    %193 = vmatprep.subr.mxu0 0.0
    %194 = vmatpush1.xpose.msra.mxu0 %v81
    %195 = vmatprep.subr.mxu0 0.0
    %196 = vmatpush1.xpose.msra.mxu0 %v82
    %197 = vmatprep.subr.mxu0 0.0
    %198 = vmatpush1.xpose.msra.mxu0 %v83
    %199 = vmatprep.subr.mxu0 0.0
    %200 = vmatpush1.xpose.msra.mxu0 %v84
    %201 = vmatprep.subr.mxu0 0.0
    %202 = vmatpush1.xpose.msra.mxu0 %v85
    %203 = vmatprep.subr.mxu0 0.0
    %204 = vmatpush1.xpose.msra.mxu0 %v86
    %205 = vmatprep.subr.mxu0 0.0
    %206 = vmatpush1.xpose.msra.mxu0 %v87
    %207 = vmatprep.subr.mxu0 0.0
    %208 = vmatpush1.xpose.msra.mxu0 %v88
    %209 = vmatprep.subr.mxu0 0.0
    %210 = vmatpush1.xpose.msra.mxu0 %v89
    %211 = vmatprep.subr.mxu0 0.0
    %212 = vmatpush1.xpose.msra.mxu0 %v90
    %213 = vmatprep.subr.mxu0 0.0
    %214 = vmatpush1.xpose.msra.mxu0 %v91
    %215 = vmatprep.subr.mxu0 0.0
    %216 = vmatpush1.xpose.msra.mxu0 %v92
    %217 = vmatprep.subr.mxu0 0.0
    %218 = vmatpush1.xpose.msra.mxu0 %v93
    %219 = vmatprep.subr.mxu0 0.0
    %220 = vmatpush1.xpose.msra.mxu0 %v94
    %221 = vmatprep.subr.mxu0 0.0
    %222 = vmatpush1.xpose.msra.mxu0 %v95
    %223 = vmatprep.subr.mxu0 0.0
    %224 = vmatpush1.xpose.msra.mxu0 0.0
    %225 = vmatprep.subr.mxu0 0.0
    %226 = vmatpush1.xpose.msra.mxu0 0.0
    %227 = vmatprep.subr.mxu0 0.0
    %228 = vmatpush1.xpose.msra.mxu0 0.0
    %229 = vmatprep.subr.mxu0 0.0
    %230 = vmatpush1.xpose.msra.mxu0 0.0
    %231 = vmatprep.subr.mxu0 0.0
    %232 = vmatpush1.xpose.msra.mxu0 0.0
    %233 = vmatprep.subr.mxu0 0.0
    %234 = vmatpush1.xpose.msra.mxu0 0.0
    %235 = vmatprep.subr.mxu0 0.0
    %236 = vmatpush1.xpose.msra.mxu0 0.0
    %237 = vmatprep.subr.mxu0 0.0
    %238 = vmatpush1.xpose.msra.mxu0 0.0
    %239 = vmatprep.subr.mxu0 0.0
    %240 = vmatpush1.xpose.msra.mxu0 0.0
    %241 = vmatprep.subr.mxu0 0.0
    %242 = vmatpush1.xpose.msra.mxu0 0.0
    %243 = vmatprep.subr.mxu0 0.0
    %244 = vmatpush1.xpose.msra.mxu0 0.0
    %245 = vmatprep.subr.mxu0 0.0
    %246 = vmatpush1.xpose.msra.mxu0 0.0
    %247 = vmatprep.subr.mxu0 0.0
    %248 = vmatpush1.xpose.msra.mxu0 0.0
    %249 = vmatprep.subr.mxu0 0.0
    %250 = vmatpush1.xpose.msra.mxu0 0.0
    %251 = vmatprep.subr.mxu0 0.0
    %252 = vmatpush1.xpose.msra.mxu0 0.0
    %253 = vmatprep.subr.mxu0 0.0
    %254 = vmatpush1.xpose.msra.mxu0 0.0
    %255 = vmatprep.mubr.f32.mxu0 0.0
    %256 = vmatmul.mubr.f32.gmra.mrb[0].mxu0 %v71
    %v257 = vpop.f32.mrb[0].mxu0
    %v258 = vadd.f32 %v190, %v257
    %v259 = vpop.f32.mrb[0].mxu0
    %260 = vdwg.mxu0
    %v261 = vadd.f32 %v182, %v258
    %262 = vst [vmem:[#allocation2] sm:$0xff] %v261
    // Predicated region
    $region46: #{tpu_custom_call.1} parent=1 // pred_check
      %p263 = pneg %p66
    $region47: #{tpu_custom_call.1} parent=1 // pred_check_branch
      %265 = sbr.rel (%p263) target = $region49
    $region48: #{tpu_custom_call.1} parent=1 // pred_region
      %v266 = vld [vmem:[%s5] sm:$0x1]
      %v267 = vld [vmem:[%s6] sm:$0x1]
      %v268 = vld [vmem:[%s4] sm:$0x1]
      %v269 = vmul.f32 %v267, %v268
      %v270 = vadd.f32 %v266, %v269
      %v271 = vld [vmem:[#allocation2] sm:$0xff]
      %v273 = vlaneseq
      %v274 = vshrl.u32 %v273, 7
      %v275 = vsub.s32 0, %v274
      %v276 = vrot.slane %v270, %v275
      %v278 = vadd.f32 %v271, %v276
      %279 = vst [vmem:[#allocation9] sm:$0xff] %v278
    $region49: #{tpu_custom_call.1} parent=1 // pred_fallthru
      _
    // Predicated region
    $region50: #{tpu_custom_call.1} parent=1 // pred_check
      _
    $region51: #{tpu_custom_call.1} parent=1 // pred_check_branch
      %281 = sbr.rel (0) target = $region53
    $region52: #{tpu_custom_call.1} parent=1 // pred_region
      %s283 = ssub.s32 128, 128
      %284 = vsyncadd [#allocation5], %s283
      %s286 = sshll.u32 [#allocation9], 4
      %s287 = int_to_ptr.vmem [resolvable:$true] %s286
      %289 = dma.vmem_to_hbm [thread:$0]  %s287, 128, %s7, [#allocation5]
    $region53: #{tpu_custom_call.1} parent=1 // pred_fallthru
      _
    // Predicated region
    $region54: #{tpu_custom_call.1} parent=1 // pred_check
      _
    $region55: #{tpu_custom_call.1} parent=1 // pred_check_branch
      %291 = sbr.rel (0) target = $region57
    $region56: #{tpu_custom_call.1} parent=1 // pred_region
      %292 = dma.done [#allocation5], 128
    $region57: #{tpu_custom_call.1} parent=1 // pred_fallthru
      _
    %293 = vsyncpa [#allocation4], 1
    %294 = vsyncpa [#allocation7], 1
    %295 = vsyncpa [#allocation5], 1

</llo_original>
